<compile_context>
chip_gen: v6e
topology: v6e:2x2x1
jax: 0.10.0
libtpu: 0.0.40
codegen_flags: <defaults>
</compile_context>

<pallas_src>
import jax
import jax.numpy as jnp
from jax.experimental import pallas as pl
from jax.experimental.pallas import tpu as pltpu


def _round_up(x, m):
    return ((x + m - 1) // m) * m


def _attention_kernel(f_ref, h_ref, uw_ref, ub_ref, ww_ref, wb_ref,
                      aw_ref, ab_ref, alpha_ref, ctx_ref):
    Bt, L, E = f_ref.shape
    A = uw_ref.shape[1]
    Lp = alpha_ref.shape[1]          # lane-padded alpha width (multiple of 128)

    f = f_ref[...]                   # (Bt, L, E)
    h = h_ref[...]                   # (Bt, D)

    # --- U(features): flatten (Bt, L) -> M so the MXU sees one (M, E)x(E, A).
    f2d = f.reshape(Bt * L, E)
    u_hs = jnp.dot(f2d, uw_ref[...], preferred_element_type=jnp.float32)
    u_hs = u_hs + ub_ref[...]                       # (Bt*L, A) + (1, A)

    # --- W(hidden): (Bt, D) @ (D, A)
    w_ah = jnp.dot(h, ww_ref[...], preferred_element_type=jnp.float32)
    w_ah = w_ah + wb_ref[...]                       # (Bt, A)

    # combined = tanh(U(f) + W(h).unsqueeze(1))
    combined = jnp.tanh(u_hs.reshape(Bt, L, A) + w_ah[:, None, :])  # (Bt, L, A)

    # --- A(combined): N=1 projection done on VPU (mul) + XLU (lane reduce),
    # avoiding a 1-column MXU matmul and the trailing (B, L, 1)->(B, L) slice.
    aw = aw_ref[...].reshape(1, 1, A)               # scoring row
    scores = jnp.sum(combined * aw, axis=-1) + ab_ref[...]          # (Bt, L)

    # softmax over the sequence axis.
    m = jnp.max(scores, axis=1, keepdims=True)
    e = jnp.exp(scores - m)
    denom = jnp.sum(e, axis=1, keepdims=True)
    # Exact reciprocal keeps the 1e-5 reference check; approx=True (EUP) is the
    # production setting and is effectively free.
    alpha = e * pl.reciprocal(denom, approx=False)  # (Bt, L)

    # context = sum_L(features * alpha): VPU broadcast-mul + sublane reduce,
    # avoiding per-batch M=1 matmuls.
    ctx = jnp.sum(f * alpha[:, :, None], axis=1)    # (Bt, E)

    # Lane-dense alpha store: pad L up to the padded output width.
    if Lp != L:
        alpha = jnp.concatenate(
            [alpha, jnp.zeros((Bt, Lp - L), dtype=alpha.dtype)], axis=1)

    alpha_ref[...] = alpha.astype(alpha_ref.dtype)
    ctx_ref[...] = ctx.astype(ctx_ref.dtype)


def _pick_batch_tile(B, L, E, D, bytes_per_el=4, vmem_budget=8 * 1024 * 1024):
    """Largest batch tile that fits a conservative VMEM budget.

    Constraints: Bt == B (single block) or Bt % 8 == 0 and B % Bt == 0 so the
    (B, D)/(B, E)/(B, Lp) block shapes satisfy the (8, 128) tiling rule.
    """
    Lp = _round_up(L, 128)
    # per-batch-row bytes for tiled operands (features + hidden + ctx + alpha),
    # x2 for double buffering of the pipelined blocks.
    per_row = (L * E + D + E + Lp) * bytes_per_el * 2
    max_bt = max(1, vmem_budget // max(per_row, 1))
    if B <= max_bt:
        return B
    best = None
    for bt in range(8, min(B, max_bt) + 1, 8):
        if B % bt == 0:
            best = bt
    # Fallback: no clean tile found (odd batch size) -> single block.
    return best if best is not None else B


def attention_forward(features, hidden_state, params):
    """features: (B, L, E) f32; hidden_state: (B, D) f32.

    params: Uw (E, A), Ub (1, A), Ww (D, A), Wb (1, A), Aw (1, A), Ab (1, 1)
    Returns (alpha (B, L), attention_weights (B, E)).
    """
    B, L, E = features.shape
    D = hidden_state.shape[1]
    A = params["Uw"].shape[1]
    Lp = _round_up(L, 128)

    Bt = _pick_batch_tile(B, L, E, D)
    assert B % Bt == 0
    grid = (B // Bt,)

    feat_spec = pl.BlockSpec((Bt, L, E), lambda b: (b, 0, 0))
    hid_spec = pl.BlockSpec((Bt, D), lambda b: (b, 0))

    def _w(arr):
        # Full-extent weight/bias block; constant index -> stays resident.
        shape = arr.shape
        return pl.BlockSpec(shape, lambda b: (0,) * len(shape))

    cost = pl.CostEstimate(
        flops=2 * B * L * E * A      # U(features)
        + 2 * B * D * A              # W(hidden)
        + 2 * B * L * A              # score projection
        + 2 * B * L * E,             # context reduction
        transcendentals=B * L * A + B * L,   # tanh + exp
        bytes_accessed=4 * (B * L * E + B * D + B * E + B * Lp
                            + E * A + D * A + 3 * A + 1),
    )

    alpha_pad, ctx = pl.pallas_call(
        _attention_kernel,
        grid=grid,
        out_shape=(
            jax.ShapeDtypeStruct((B, Lp), jnp.float32),
            jax.ShapeDtypeStruct((B, E), jnp.float32),
        ),
        in_specs=[
            feat_spec, hid_spec,
            _w(params["Uw"]), _w(params["Ub"]),
            _w(params["Ww"]), _w(params["Wb"]),
            _w(params["Aw"]), _w(params["Ab"]),
        ],
        out_specs=(
            pl.BlockSpec((Bt, Lp), lambda b: (b, 0)),
            pl.BlockSpec((Bt, E), lambda b: (b, 0)),
        ),
        compiler_params=pltpu.CompilerParams(
            dimension_semantics=("parallel",),     # megacore-shard batch (v7x)
            vmem_limit_bytes=32 * 1024 * 1024,
        ),
        cost_estimate=cost,
    )(features, hidden_state,
      params["Uw"], params["Ub"],
      params["Ww"], params["Wb"],
      params["Aw"], params["Ab"])

    return alpha_pad[:, :L], ctx


def _reference(features, hidden_state, params):
    u_hs = features @ params["Uw"] + params["Ub"]
    w_ah = hidden_state @ params["Ww"] + params["Wb"]
    combined = jnp.tanh(u_hs + w_ah[:, None, :])
    scores = jnp.einsum('bla,a->bl', combined, params["Aw"][0]) + params["Ab"][0, 0]
    alpha = jax.nn.softmax(scores, axis=1)
    ctx = jnp.sum(features * alpha[:, :, None], axis=1)
    return alpha, ctx


if __name__ == "__main__":
    # Small shapes consistent with the module.
    B, L = 2, 8              # batch, number of encoder positions
    encoder_dim = 32
    decoder_dim = 32
    attention_dim = 32

    key = jax.random.PRNGKey(0)
    kf, kh, k1, k2, k3, k4, k5, k6 = jax.random.split(key, 8)

    features = jax.random.normal(kf, (B, L, encoder_dim), jnp.float32)
    hidden_state = jax.random.normal(kh, (B, decoder_dim), jnp.float32)

    # Parameters: U/W stored as (in, out) = PyTorch weight.T; A stored as its
    # native (1, attention_dim) row; biases as 2D rows.
    params = {
        "Uw": 0.1 * jax.random.normal(k1, (encoder_dim, attention_dim), jnp.float32),
        "Ub": 0.1 * jax.random.normal(k2, (1, attention_dim), jnp.float32),
        "Ww": 0.1 * jax.random.normal(k3, (decoder_dim, attention_dim), jnp.float32),
        "Wb": 0.1 * jax.random.normal(k4, (1, attention_dim), jnp.float32),
        "Aw": 0.1 * jax.random.normal(k5, (1, attention_dim), jnp.float32),
        "Ab": 0.1 * jax.random.normal(k6, (1, 1), jnp.float32),
    }

    alpha, attn_weights = attention_forward(features, hidden_state, params)
    jax.block_until_ready((alpha, attn_weights))

    alpha_ref, attn_ref = _reference(features, hidden_state, params)
    assert alpha.shape == (B, L) and attn_weights.shape == (B, encoder_dim)
    assert jnp.allclose(alpha, alpha_ref, atol=1e-5, rtol=1e-5)
    assert jnp.allclose(attn_weights, attn_ref, atol=1e-5, rtol=1e-5)

    print("KERNEL_OK")
</pallas_src>

<mosaic_0001>
module attributes {stable_mosaic.version = 11 : i64} {
  func.func @_attention_kernel(%arg0: i32, %arg1: memref<2x8x32xf32, #tpu.memory_space<vmem>>, %arg2: memref<2x32xf32, #tpu.memory_space<vmem>>, %arg3: memref<32x32xf32, #tpu.memory_space<vmem>>, %arg4: memref<1x32xf32, #tpu.memory_space<vmem>>, %arg5: memref<32x32xf32, #tpu.memory_space<vmem>>, %arg6: memref<1x32xf32, #tpu.memory_space<vmem>>, %arg7: memref<1x32xf32, #tpu.memory_space<vmem>>, %arg8: memref<1x1xf32, #tpu.memory_space<vmem>>, %arg9: memref<2x128xf32, #tpu.memory_space<vmem>>, %arg10: memref<2x32xf32, #tpu.memory_space<vmem>>) attributes {dimension_semantics = [#tpu.dimension_semantics<parallel>], iteration_bounds = array<i64: 1>, scalar_prefetch = 0 : i64, scratch_operands = 0 : i64, tpu.core_type = #tpu.core_type<tc>, window_params = [{transform_indices = @transform_0, window_bounds = array<i64: 2, 8, 32>}, {transform_indices = @transform_1, window_bounds = array<i64: 2, 32>}, {pipeline_mode = #tpu.pipeline_mode<synchronous>, transform_indices = @transform_2, window_bounds = array<i64: 32, 32>}, {pipeline_mode = #tpu.pipeline_mode<synchronous>, transform_indices = @transform_3, window_bounds = array<i64: 1, 32>}, {pipeline_mode = #tpu.pipeline_mode<synchronous>, transform_indices = @transform_4, window_bounds = array<i64: 32, 32>}, {pipeline_mode = #tpu.pipeline_mode<synchronous>, transform_indices = @transform_5, window_bounds = array<i64: 1, 32>}, {pipeline_mode = #tpu.pipeline_mode<synchronous>, transform_indices = @transform_6, window_bounds = array<i64: 1, 32>}, {pipeline_mode = #tpu.pipeline_mode<synchronous>, transform_indices = @transform_7, window_bounds = array<i64: 1, 1>}, {transform_indices = @transform_8, window_bounds = array<i64: 2, 128>}, {transform_indices = @transform_9, window_bounds = array<i64: 2, 32>}]} {
    %c0 = arith.constant 0 : index
    %c0_0 = arith.constant 0 : index
    %c0_1 = arith.constant 0 : index
    %0 = vector.load %arg1[%c0, %c0_0, %c0_1] : memref<2x8x32xf32, #tpu.memory_space<vmem>>, vector<2x8x32xf32>
    %c0_2 = arith.constant 0 : index
    %c0_3 = arith.constant 0 : index
    %1 = vector.load %arg2[%c0_2, %c0_3] : memref<2x32xf32, #tpu.memory_space<vmem>>, vector<2x32xf32>
    %2 = vector.shape_cast %0 : vector<2x8x32xf32> to vector<16x32xf32>
    %c0_4 = arith.constant 0 : index
    %c0_5 = arith.constant 0 : index
    %3 = vector.load %arg3[%c0_4, %c0_5] : memref<32x32xf32, #tpu.memory_space<vmem>>, vector<32x32xf32>
    %cst = arith.constant dense<0.000000e+00> : vector<16x32xf32>
    %4 = tpu.matmul %2, %3, %cst {dimension_numbers = #tpu.dot_dimension_numbers<[1], [0], [0], [1], [0, 0, 1, 1], [], []>} : vector<16x32xf32>, vector<32x32xf32>, vector<16x32xf32> -> vector<16x32xf32>
    %c0_6 = arith.constant 0 : index
    %c0_7 = arith.constant 0 : index
    %5 = vector.load %arg4[%c0_6, %c0_7] : memref<1x32xf32, #tpu.memory_space<vmem>>, vector<1x32xf32>
    %6 = vector.broadcast %5 : vector<1x32xf32> to vector<16x32xf32>
    %7 = arith.addf %4, %6 : vector<16x32xf32>
    %c0_8 = arith.constant 0 : index
    %c0_9 = arith.constant 0 : index
    %8 = vector.load %arg5[%c0_8, %c0_9] : memref<32x32xf32, #tpu.memory_space<vmem>>, vector<32x32xf32>
    %cst_10 = arith.constant dense<0.000000e+00> : vector<2x32xf32>
    %9 = tpu.matmul %1, %8, %cst_10 {dimension_numbers = #tpu.dot_dimension_numbers<[1], [0], [0], [1], [0, 0, 1, 1], [], []>} : vector<2x32xf32>, vector<32x32xf32>, vector<2x32xf32> -> vector<2x32xf32>
    %c0_11 = arith.constant 0 : index
    %c0_12 = arith.constant 0 : index
    %10 = vector.load %arg6[%c0_11, %c0_12] : memref<1x32xf32, #tpu.memory_space<vmem>>, vector<1x32xf32>
    %11 = vector.broadcast %10 : vector<1x32xf32> to vector<2x32xf32>
    %12 = arith.addf %9, %11 : vector<2x32xf32>
    %13 = vector.shape_cast %7 : vector<16x32xf32> to vector<2x8x32xf32>
    %14 = vector.shape_cast %12 : vector<2x32xf32> to vector<2x1x32xf32>
    %15 = vector.broadcast %14 : vector<2x1x32xf32> to vector<2x8x32xf32>
    %16 = arith.addf %13, %15 : vector<2x8x32xf32>
    %17 = math.tanh %16 : vector<2x8x32xf32>
    %c0_13 = arith.constant 0 : index
    %c0_14 = arith.constant 0 : index
    %18 = vector.load %arg7[%c0_13, %c0_14] : memref<1x32xf32, #tpu.memory_space<vmem>>, vector<1x32xf32>
    %19 = vector.shape_cast %18 : vector<1x32xf32> to vector<1x1x32xf32>
    %20 = vector.broadcast %19 : vector<1x1x32xf32> to vector<2x8x32xf32>
    %21 = arith.mulf %17, %20 : vector<2x8x32xf32>
    %cst_15 = arith.constant dense<0.000000e+00> : vector<2x8xf32>
    %22 = vector.multi_reduction <add>, %21, %cst_15 [2] : vector<2x8x32xf32> to vector<2x8xf32>
    %c0_16 = arith.constant 0 : index
    %c0_17 = arith.constant 0 : index
    %23 = vector.load %arg8[%c0_16, %c0_17] : memref<1x1xf32, #tpu.memory_space<vmem>>, vector<1x1xf32>
    %24 = vector.broadcast %23 : vector<1x1xf32> to vector<2x8xf32>
    %25 = arith.addf %22, %24 : vector<2x8xf32>
    %cst_18 = arith.constant dense<0xFF800000> : vector<2xf32>
    %26 = vector.multi_reduction <maximumf>, %25, %cst_18 [1] : vector<2x8xf32> to vector<2xf32>
    %27 = vector.shape_cast %26 : vector<2xf32> to vector<2x1xf32>
    %28 = vector.broadcast %27 : vector<2x1xf32> to vector<2x8xf32>
    %29 = arith.subf %25, %28 : vector<2x8xf32>
    %30 = math.exp %29 : vector<2x8xf32>
    %cst_19 = arith.constant dense<0.000000e+00> : vector<2xf32>
    %31 = vector.multi_reduction <add>, %30, %cst_19 [1] : vector<2x8xf32> to vector<2xf32>
    %32 = vector.shape_cast %31 : vector<2xf32> to vector<2x1xf32>
    %33 = tpu.reciprocal %32 : vector<2x1xf32> -> vector<2x1xf32>
    %34 = vector.broadcast %33 : vector<2x1xf32> to vector<2x8xf32>
    %35 = arith.mulf %30, %34 : vector<2x8xf32>
    %36 = vector.shape_cast %35 : vector<2x8xf32> to vector<2x8x1xf32>
    %37 = vector.broadcast %36 : vector<2x8x1xf32> to vector<2x8x32xf32>
    %38 = arith.mulf %0, %37 : vector<2x8x32xf32>
    %cst_20 = arith.constant dense<0.000000e+00> : vector<2x32xf32>
    %39 = vector.multi_reduction <add>, %38, %cst_20 [1] : vector<2x8x32xf32> to vector<2x32xf32>
    %cst_21 = arith.constant 0.000000e+00 : f32
    %40 = vector.broadcast %cst_21 : f32 to vector<2x120xf32>
    %41 = tpu.concatenate %35, %40 in 1 : vector<2x8xf32>, vector<2x120xf32> -> vector<2x128xf32>
    %c0_22 = arith.constant 0 : index
    %c0_23 = arith.constant 0 : index
    %42 = vector.load %arg9[%c0_22, %c0_23] : memref<2x128xf32, #tpu.memory_space<vmem>>, vector<2x128xf32>
    tpu.vector_store %arg9[%c0_22, %c0_23], %41 {strides = array<i32>} : memref<2x128xf32, #tpu.memory_space<vmem>>, vector<2x128xf32>,
    %c0_24 = arith.constant 0 : index
    %c0_25 = arith.constant 0 : index
    %43 = vector.load %arg10[%c0_24, %c0_25] : memref<2x32xf32, #tpu.memory_space<vmem>>, vector<2x32xf32>
    tpu.vector_store %arg10[%c0_24, %c0_25], %39 {strides = array<i32>} : memref<2x32xf32, #tpu.memory_space<vmem>>, vector<2x32xf32>,
    return
  }
  func.func @transform_0(%arg0: i32) -> (i32, i32, i32) {
    %c0_i32 = arith.constant 0 : i32
    %c0_i32_0 = arith.constant 0 : i32
    %c0_i32_1 = arith.constant 0 : i32
    return %arg0, %c0_i32, %c0_i32_0 : i32, i32, i32
  }
  func.func @transform_1(%arg0: i32) -> (i32, i32) {
    %c0_i32 = arith.constant 0 : i32
    %c0_i32_0 = arith.constant 0 : i32
    return %arg0, %c0_i32 : i32, i32
  }
  func.func @transform_2(%arg0: i32) -> (i32, i32) {
    %c0_i32 = arith.constant 0 : i32
    %c0_i32_0 = arith.constant 0 : i32
    %c0_i32_1 = arith.constant 0 : i32
    return %c0_i32, %c0_i32_0 : i32, i32
  }
  func.func @transform_3(%arg0: i32) -> (i32, i32) {
    %c0_i32 = arith.constant 0 : i32
    %c0_i32_0 = arith.constant 0 : i32
    %c0_i32_1 = arith.constant 0 : i32
    return %c0_i32, %c0_i32_0 : i32, i32
  }
  func.func @transform_4(%arg0: i32) -> (i32, i32) {
    %c0_i32 = arith.constant 0 : i32
    %c0_i32_0 = arith.constant 0 : i32
    %c0_i32_1 = arith.constant 0 : i32
    return %c0_i32, %c0_i32_0 : i32, i32
  }
  func.func @transform_5(%arg0: i32) -> (i32, i32) {
    %c0_i32 = arith.constant 0 : i32
    %c0_i32_0 = arith.constant 0 : i32
    %c0_i32_1 = arith.constant 0 : i32
    return %c0_i32, %c0_i32_0 : i32, i32
  }
  func.func @transform_6(%arg0: i32) -> (i32, i32) {
    %c0_i32 = arith.constant 0 : i32
    %c0_i32_0 = arith.constant 0 : i32
    %c0_i32_1 = arith.constant 0 : i32
    return %c0_i32, %c0_i32_0 : i32, i32
  }
  func.func @transform_7(%arg0: i32) -> (i32, i32) {
    %c0_i32 = arith.constant 0 : i32
    %c0_i32_0 = arith.constant 0 : i32
    %c0_i32_1 = arith.constant 0 : i32
    return %c0_i32, %c0_i32_0 : i32, i32
  }
  func.func @transform_8(%arg0: i32) -> (i32, i32) {
    %c0_i32 = arith.constant 0 : i32
    %c0_i32_0 = arith.constant 0 : i32
    return %arg0, %c0_i32 : i32, i32
  }
  func.func @transform_9(%arg0: i32) -> (i32, i32) {
    %c0_i32 = arith.constant 0 : i32
    %c0_i32_0 = arith.constant 0 : i32
    return %arg0, %c0_i32 : i32, i32
  }
}

</mosaic_0001>

<llo_original>
// kernel: tpu_custom_call.1
$region0: #{tpu_custom_call.1}
  #allocation0 [shape = 'u32[]', space=smem, size = 0x4, offset = 0x4, fixed_abs, tag = 'smem constant byte address 0x4 - core index']
  #allocation1 [shape = 'u32[144,128]{1,0:T(1,128)}', space=vmem, size = 0x12000, scoped, tag = 'internal scratch']
  #allocation2 [shape = 'f32[1,1]{1,0:T(1,128)S(1)}', space=vmem, size = 0x200, scoped, tag = 'scoped memory for tpu_custom_call.1']
  %s0 = inlined_call_operand.hbm [shape: f32[2,8,32], index: 0, kind: input, shape index: {}]
  %s1 = inlined_call_operand.vmem [shape: f32[2,32], index: 1, kind: input, shape index: {}]
  %s2 = inlined_call_operand.hbm [shape: f32[32,32], index: 2, kind: input, shape index: {}]
  %s3 = inlined_call_operand.vmem [shape: f32[1,32], index: 3, kind: input, shape index: {}]
  %s4 = inlined_call_operand.hbm [shape: f32[32,32], index: 4, kind: input, shape index: {}]
  %s5 = inlined_call_operand.vmem [shape: f32[1,32], index: 5, kind: input, shape index: {}]
  %s6 = inlined_call_operand.vmem [shape: f32[1,32], index: 6, kind: input, shape index: {}]
  %s7 = inlined_call_operand.<no memory space> [shape: f32[1,1], index: 7, kind: input, shape index: {}]
  %s8 = inlined_call_operand.hbm [shape: f32[2,128], index: 8, kind: output, shape index: {0}]
  %s9 = inlined_call_operand.hbm [shape: f32[2,32], index: 9, kind: output, shape index: {1}]
  %10 = xla_tuple %s8, %s9
  %s11 = sld [smem:[#allocation0]]
  $region62: #{tpu_custom_call.1} parent=0
    _
  %s13 = ssub.s32 1, %s11
  %s14 = scalar_select 0, %s13, %s11
  %v15 = vstv %s7
  %16 = vst [vmem:[#allocation2] sm:$0x1] %v15
  $region1: #{tpu_custom_call.1} parent=0
    #allocation3 [shape = 'u8[8192]{0}', space=vmem, size = 0x2000, scoped, tag = 'input window, operand 0, single buffered']
    #allocation4 [shape = 's32[1]{0}', space=sflag, size = 0x4, scoped, tag = 'scoped memory for tpu_custom_call.1']
    #allocation5 [shape = 's32[1]{0}', space=sflag, size = 0x4, scoped, tag = 'scoped memory for tpu_custom_call.1']
    #allocation6 [shape = 'u8[16384]{0}', space=vmem, size = 0x4000, scoped, tag = 'input window, operand 2, single buffered']
    #allocation7 [shape = 's32[1]{0}', space=sflag, size = 0x4, scoped, tag = 'scoped memory for tpu_custom_call.1']
    #allocation8 [shape = 'u8[16384]{0}', space=vmem, size = 0x4000, scoped, tag = 'input window, operand 4, single buffered']
    #allocation9 [shape = 'u8[1024]{0}', space=vmem, size = 0x400, scoped, tag = 'output window, operand 0, single buffered']
    #allocation10 [shape = 'u8[1024]{0}', space=vmem, size = 0x400, scoped, tag = 'output window, operand 1, single buffered']
    #allocation11 [shape = 's32[1]{0}', space=sflag, size = 0x4, scoped, tag = 'scoped memory for tpu_custom_call.1']
    %17 = vsyncpa [#allocation4], 0
    %18 = vsyncpa [#allocation7], 0
    %19 = vsyncpa [#allocation5], 0
    %20 = vsyncpa [#allocation11], 0
    // Predicated region
    $region2: #{tpu_custom_call.1} parent=1 // pred_check
      _
    $region3: #{tpu_custom_call.1} parent=1 // pred_check_branch
      %22 = sbr.rel (0) target = $region5
    $region4: #{tpu_custom_call.1} parent=1 // pred_region
      %s24 = ssub.s32 256, 256
      %25 = vsyncadd [#allocation4], %s24
      %s26 = sshll.u32 [#allocation3], 4
      %s27 = int_to_ptr.vmem [resolvable:$true] %s26
      %32 = dma.hbm_to_vmem [thread:$0]  %s0, 256, %s27, [#allocation4], 128, 128, 8
    $region5: #{tpu_custom_call.1} parent=1 // pred_fallthru
      _
    // Predicated region
    $region6: #{tpu_custom_call.1} parent=1 // pred_check
      _
    $region7: #{tpu_custom_call.1} parent=1 // pred_check_branch
      %34 = sbr.rel (0) target = $region9
    $region8: #{tpu_custom_call.1} parent=1 // pred_region
      _
    $region9: #{tpu_custom_call.1} parent=1 // pred_fallthru
      _
    // Predicated region
    $region10: #{tpu_custom_call.1} parent=1 // pred_check
      _
    $region11: #{tpu_custom_call.1} parent=1 // pred_check_branch
      %36 = sbr.rel (0) target = $region13
    $region12: #{tpu_custom_call.1} parent=1 // pred_region
      %s38 = ssub.s32 512, 512
      %39 = vsyncadd [#allocation7], %s38
      %s40 = sshll.u32 [#allocation6], 4
      %s41 = int_to_ptr.vmem [resolvable:$true] %s40
      %46 = dma.hbm_to_vmem [thread:$0]  %s2, 512, %s41, [#allocation7], 128, 128, 8
    $region13: #{tpu_custom_call.1} parent=1 // pred_fallthru
      _
    // Predicated region
    $region14: #{tpu_custom_call.1} parent=1 // pred_check
      _
    $region15: #{tpu_custom_call.1} parent=1 // pred_check_branch
      %48 = sbr.rel (0) target = $region17
    $region16: #{tpu_custom_call.1} parent=1 // pred_region
      _
    $region17: #{tpu_custom_call.1} parent=1 // pred_fallthru
      _
    // Predicated region
    $region18: #{tpu_custom_call.1} parent=1 // pred_check
      _
    $region19: #{tpu_custom_call.1} parent=1 // pred_check_branch
      %50 = sbr.rel (0) target = $region21
    $region20: #{tpu_custom_call.1} parent=1 // pred_region
      %s52 = ssub.s32 512, 512
      %53 = vsyncadd [#allocation7], %s52
      %s54 = sshll.u32 [#allocation8], 4
      %s55 = int_to_ptr.vmem [resolvable:$true] %s54
      %60 = dma.hbm_to_vmem [thread:$0]  %s4, 512, %s55, [#allocation7], 128, 128, 8
    $region21: #{tpu_custom_call.1} parent=1 // pred_fallthru
      _
    // Predicated region
    $region22: #{tpu_custom_call.1} parent=1 // pred_check
      _
    $region23: #{tpu_custom_call.1} parent=1 // pred_check_branch
      %62 = sbr.rel (0) target = $region25
    $region24: #{tpu_custom_call.1} parent=1 // pred_region
      _
    $region25: #{tpu_custom_call.1} parent=1 // pred_fallthru
      _
    // Predicated region
    $region26: #{tpu_custom_call.1} parent=1 // pred_check
      _
    $region27: #{tpu_custom_call.1} parent=1 // pred_check_branch
      %64 = sbr.rel (0) target = $region29
    $region28: #{tpu_custom_call.1} parent=1 // pred_region
      _
    $region29: #{tpu_custom_call.1} parent=1 // pred_fallthru
      _
    // Predicated region
    $region30: #{tpu_custom_call.1} parent=1 // pred_check
      _
    $region31: #{tpu_custom_call.1} parent=1 // pred_check_branch
      %66 = sbr.rel (0) target = $region33
    $region32: #{tpu_custom_call.1} parent=1 // pred_region
      _
    $region33: #{tpu_custom_call.1} parent=1 // pred_fallthru
      _
    // Predicated region
    $region34: #{tpu_custom_call.1} parent=1 // pred_check
      _
    $region35: #{tpu_custom_call.1} parent=1 // pred_check_branch
      %68 = sbr.rel (0) target = $region37
    $region36: #{tpu_custom_call.1} parent=1 // pred_region
      %69 = dma.done [#allocation4], 256
    $region37: #{tpu_custom_call.1} parent=1 // pred_fallthru
      _
    // Predicated region
    $region38: #{tpu_custom_call.1} parent=1 // pred_check
      _
    $region39: #{tpu_custom_call.1} parent=1 // pred_check_branch
      %71 = sbr.rel (0) target = $region41
    $region40: #{tpu_custom_call.1} parent=1 // pred_region
      %72 = dma.done [#allocation7], 512
    $region41: #{tpu_custom_call.1} parent=1 // pred_fallthru
      _
    // Predicated region
    $region42: #{tpu_custom_call.1} parent=1 // pred_check
      _
    $region43: #{tpu_custom_call.1} parent=1 // pred_check_branch
      %74 = sbr.rel (0) target = $region45
    $region44: #{tpu_custom_call.1} parent=1 // pred_region
      %75 = dma.done [#allocation7], 512
    $region45: #{tpu_custom_call.1} parent=1 // pred_fallthru
      _
    %v76 = vld [vmem:[#allocation3] sm:$0xff]
    %v77 = vld [vmem:[#allocation3 + $0x8] sm:$0xff]
    %v78 = vld [vmem:[%s1] sm:$0x3]
    %v79 = vld [vmem:[#allocation6] sm:$0xff]
    %v80 = vld [vmem:[#allocation6 + $0x8] sm:$0xff]
    %v81 = vld [vmem:[#allocation6 + $0x10] sm:$0xff]
    %v82 = vld [vmem:[#allocation6 + $0x18] sm:$0xff]
    %v83 = vld [vmem:[%s3] sm:$0x1]
    %v85 = vlaneseq
    %v86 = vshrl.u32 %v85, 7
    %v87 = vsub.s32 0, %v86
    %v88 = vrot.slane %v83, %v87
    %vm90 = vcmask 261120
    %v92 = vsel %vm90, %v76, 0
    %v95 = vsel %vm90, %v77, 0
    %97 = vmatprep.subr.mxu0 0.0
    %98 = vmatpush1.msra.mxu0 0.0
    %99 = vmatprep.subr.mxu0 0.0
    %100 = vmatpush1.msra.mxu0 0.0
    %101 = vmatprep.subr.mxu0 0.0
    %102 = vmatpush1.msra.mxu0 0.0
    %103 = vmatprep.subr.mxu0 0.0
    %104 = vmatpush1.msra.mxu0 0.0
    %105 = vmatprep.subr.mxu0 0.0
    %106 = vmatpush1.msra.mxu0 0.0
    %107 = vmatprep.subr.mxu0 0.0
    %108 = vmatpush1.msra.mxu0 0.0
    %109 = vmatprep.subr.mxu0 0.0
    %110 = vmatpush1.msra.mxu0 0.0
    %111 = vmatprep.subr.mxu0 0.0
    %112 = vmatpush1.msra.mxu0 0.0
    %113 = vmatprep.subr.mxu0 0.0
    %114 = vmatpush1.msra.mxu0 0.0
    %115 = vmatprep.subr.mxu0 0.0
    %116 = vmatpush1.msra.mxu0 0.0
    %117 = vmatprep.subr.mxu0 0.0
    %118 = vmatpush1.msra.mxu0 0.0
    %119 = vmatprep.subr.mxu0 0.0
    %120 = vmatpush1.msra.mxu0 0.0
    %121 = vmatprep.subr.mxu0 0.0
    %122 = vmatpush1.msra.mxu0 %v82
    %123 = vmatprep.subr.mxu0 0.0
    %124 = vmatpush1.msra.mxu0 %v81
    %125 = vmatprep.subr.mxu0 0.0
    %126 = vmatpush1.msra.mxu0 %v80
    %127 = vmatprep.subr.mxu0 0.0
    %128 = vmatpush1.msra.mxu0 %v79
    %129 = vmatprep.subr.mxu0 0.0
    %130 = vmatpush2.msra.mxu0 0.0
    %131 = vmatprep.subr.mxu0 0.0
    %132 = vmatpush2.msra.mxu0 0.0
    %133 = vmatprep.subr.mxu0 0.0
    %134 = vmatpush2.msra.mxu0 0.0
    %135 = vmatprep.subr.mxu0 0.0
    %136 = vmatpush2.msra.mxu0 0.0
    %137 = vmatprep.subr.mxu0 0.0
    %138 = vmatpush2.msra.mxu0 0.0
    %139 = vmatprep.subr.mxu0 0.0
    %140 = vmatpush2.msra.mxu0 0.0
    %141 = vmatprep.subr.mxu0 0.0
    %142 = vmatpush2.msra.mxu0 0.0
    %143 = vmatprep.subr.mxu0 0.0
    %144 = vmatpush2.msra.mxu0 0.0
    %145 = vmatprep.subr.mxu0 0.0
    %146 = vmatpush2.msra.mxu0 0.0
    %147 = vmatprep.subr.mxu0 0.0
    %148 = vmatpush2.msra.mxu0 0.0
    %149 = vmatprep.subr.mxu0 0.0
    %150 = vmatpush2.msra.mxu0 0.0
    %151 = vmatprep.subr.mxu0 0.0
    %152 = vmatpush2.msra.mxu0 0.0
    %153 = vmatprep.subr.mxu0 0.0
    %154 = vmatpush2.msra.mxu0 0.0
    %155 = vmatprep.subr.mxu0 0.0
    %156 = vmatpush2.msra.mxu0 0.0
    %157 = vmatprep.subr.mxu0 0.0
    %158 = vmatpush2.msra.mxu0 0.0
    %159 = vmatprep.subr.mxu0 0.0
    %160 = vmatpush2.msra.mxu0 0.0
    %161 = vmatprep.mubr.f32.mxu0 0.0
    %162 = vmatmul.mubr.f32.gmra.mxu0 %v92
    %v163 = vpop.f32.mrf.mxu0
    %v164 = vadd.f32 %v88, %v163
    %v165 = vpop.f32.mrf.mxu0
    %166 = vmatprep.mubr.f32.mxu0 0.0
    %167 = vmatmul.mubr.f32.gmra.mxu0 %v95
    %v168 = vpop.f32.mrf.mxu0
    %v169 = vadd.f32 %v88, %v168
    %v170 = vpop.f32.mrf.mxu0
    %171 = vdwg.mxu0
    %v172 = vld [vmem:[#allocation8] sm:$0xff]
    %v173 = vld [vmem:[#allocation8 + $0x8] sm:$0xff]
    %v174 = vld [vmem:[#allocation8 + $0x10] sm:$0xff]
    %v175 = vld [vmem:[#allocation8 + $0x18] sm:$0xff]
    %v176 = vld [vmem:[%s5] sm:$0x1]
    %v178 = vlaneseq
    %v179 = vshrl.u32 %v178, 7
    %v180 = vsub.s32 0, %v179
    %v181 = vrot.slane %v176, %v180
    %v184 = vsel %vm90, %v78, 0
    %186 = vmatprep.subr.mxu0 0.0
    %187 = vmatpush1.msra.mxu0 0.0
    %188 = vmatprep.subr.mxu0 0.0
    %189 = vmatpush1.msra.mxu0 0.0
    %190 = vmatprep.subr.mxu0 0.0
    %191 = vmatpush1.msra.mxu0 0.0
    %192 = vmatprep.subr.mxu0 0.0
    %193 = vmatpush1.msra.mxu0 0.0
    %194 = vmatprep.subr.mxu0 0.0
    %195 = vmatpush1.msra.mxu0 0.0
    %196 = vmatprep.subr.mxu0 0.0
    %197 = vmatpush1.msra.mxu0 0.0
    %198 = vmatprep.subr.mxu0 0.0
    %199 = vmatpush1.msra.mxu0 0.0
    %200 = vmatprep.subr.mxu0 0.0
    %201 = vmatpush1.msra.mxu0 0.0
    %202 = vmatprep.subr.mxu0 0.0
    %203 = vmatpush1.msra.mxu0 0.0
    %204 = vmatprep.subr.mxu0 0.0
    %205 = vmatpush1.msra.mxu0 0.0
    %206 = vmatprep.subr.mxu0 0.0
    %207 = vmatpush1.msra.mxu0 0.0
    %208 = vmatprep.subr.mxu0 0.0
    %209 = vmatpush1.msra.mxu0 0.0
    %210 = vmatprep.subr.mxu0 0.0
    %211 = vmatpush1.msra.mxu0 %v175
    %212 = vmatprep.subr.mxu0 0.0
    %213 = vmatpush1.msra.mxu0 %v174
    %214 = vmatprep.subr.mxu0 0.0
    %215 = vmatpush1.msra.mxu0 %v173
    %216 = vmatprep.subr.mxu0 0.0
    %217 = vmatpush1.msra.mxu0 %v172
    %218 = vmatprep.subr.mxu0 0.0
    %219 = vmatpush2.msra.mxu0 0.0
    %220 = vmatprep.subr.mxu0 0.0
    %221 = vmatpush2.msra.mxu0 0.0
    %222 = vmatprep.subr.mxu0 0.0
    %223 = vmatpush2.msra.mxu0 0.0
    %224 = vmatprep.subr.mxu0 0.0
    %225 = vmatpush2.msra.mxu0 0.0
    %226 = vmatprep.subr.mxu0 0.0
    %227 = vmatpush2.msra.mxu0 0.0
    %228 = vmatprep.subr.mxu0 0.0
    %229 = vmatpush2.msra.mxu0 0.0
    %230 = vmatprep.subr.mxu0 0.0
    %231 = vmatpush2.msra.mxu0 0.0
    %232 = vmatprep.subr.mxu0 0.0
    %233 = vmatpush2.msra.mxu0 0.0
    %234 = vmatprep.subr.mxu0 0.0
    %235 = vmatpush2.msra.mxu0 0.0
    %236 = vmatprep.subr.mxu0 0.0
    %237 = vmatpush2.msra.mxu0 0.0
    %238 = vmatprep.subr.mxu0 0.0
    %239 = vmatpush2.msra.mxu0 0.0
    %240 = vmatprep.subr.mxu0 0.0
    %241 = vmatpush2.msra.mxu0 0.0
    %242 = vmatprep.subr.mxu0 0.0
    %243 = vmatpush2.msra.mxu0 0.0
    %244 = vmatprep.subr.mxu0 0.0
    %245 = vmatpush2.msra.mxu0 0.0
    %246 = vmatprep.subr.mxu0 0.0
    %247 = vmatpush2.msra.mxu0 0.0
    %248 = vmatprep.subr.mxu0 0.0
    %249 = vmatpush2.msra.mxu0 0.0
    %250 = vmatprep.mubr.f32.mxu0 0.0
    %251 = vmatmul.mubr.f32.gmra.mxu0 %v184
    %v252 = vpop.f32.mrf.mxu0
    %v253 = vadd.f32 %v181, %v252
    %v254 = vpop.f32.mrf.mxu0
    %255 = vdwg.mxu0
    %v258 = vunpack.c.l.s4 1966171168
    %v259 = vunpack.c.0.s8 %v258
    %v260 = vlaneseq
    %v261 = vshrl.u32 %v260, 7
    %v262 = vsub.s32 %v259, %v261
    %v263 = vrot.slane %v253, %v262
    %v264 = vcombine.high %v263, %v263
    %v266 = vunpack.c.l.s4 1966171168
    %v267 = vunpack.c.0.s8 %v266
    %v268 = vlaneseq
    %v269 = vshrl.u32 %v268, 7
    %v270 = vsub.s32 %v267, %v269
    %v271 = vrot.slane %v263, %v270
    %v273 = vunpack.c.l.s4 1966171168
    %v274 = vunpack.c.0.s8 %v273
    %v275 = vlaneseq
    %v276 = vshrl.u32 %v275, 7
    %v277 = vsub.s32 %v274, %v276
    %v278 = vrot.slane %v264, %v277
    %v279 = vlaneseq
    %v280 = vshrl.u32 %v279, 7
    %v281 = vsub.s32 0, %v280
    %v282 = vrot.slane %v271, %v281
    %v283 = vlaneseq
    %v284 = vshrl.u32 %v283, 7
    %v285 = vsub.s32 0, %v284
    %v286 = vrot.slane %v278, %v285
    %v289 = vadd.f32 %v164, %v282
    %v290 = vadd.f32 %v169, %v286
    %v291 = vtanh.pop %v289
    %v292 = vtanh.pop %v290
    %v293 = vld [vmem:[%s6] sm:$0x1]
    %v295 = vlaneseq
    %v296 = vshrl.u32 %v295, 7
    %v297 = vsub.s32 0, %v296
    %v298 = vrot.slane %v293, %v297
    %v300 = vmul.f32 %v291, %v298
    %v301 = vmul.f32 %v292, %v298
    %v302 = vsel %vm90, %v300, 0.0
    %303 = vadd.xlane.f32.xlu0 %v302
    %v304 = vpop.xlane.xlu0 %303
    %v305 = vsel %vm90, %v301, 0.0
    %306 = vadd.xlane.f32.xlu0 %v305
    %v307 = vpop.xlane.xlu0 %306
    %v308 = vld [vmem:[#allocation2] sm:$0x1]
    %v310 = vlaneseq
    %v311 = vshrl.u32 %v310, 7
    %v312 = vsub.s32 0, %v311
    %v313 = vrot.slane %v308, %v312
    %314 = vset.pattern.permute.xlu0 0
    %315 = vperm.xlu0 %314, %v313
    %v316 = vpop.permute.xlu0 %315
    %v318 = vadd.f32 %v304, %v316
    %v319 = vadd.f32 %v307, %v316
    %v322 = vlaneseq
    %v323 = vand.u32 %v322, 127
    %v324 = vlaneseq
    %v325 = vshrl.u32 %v324, 7
    %v326 = vsub.s32 %v323, %v325
    %v327 = vrot.slane %v318, %v326
    %v328 = vlaneseq
    %v329 = vshrl.u32 %v328, 7
    %v330 = vsub.s32 %v323, %v329
    %v331 = vrot.slane %v319, %v330
    %vm332 = vcmask 1041409
    %v333 = vsel %vm332, %v331, %v327
    %vm335 = vcmask 58368
    %v336 = vsel %vm335, %v333, -inf
    %337 = vmax.xlane.f32.xlu0 %v336
    %v338 = vpop.xlane.xlu0 %337
    %v340 = vlaneseq
    %v341 = vshrl.u32 %v340, 7
    %v342 = vsub.s32 0, %v341
    %v343 = vrot.slane %v338, %v342
    %v344 = vlaneseq
    %v345 = vshrl.u32 %v344, 7
    %v346 = vsub.s32 1, %v345
    %v347 = vrot.slane %v338, %v346
    %v350 = vsub.f32 %v318, %v343
    %v351 = vsub.f32 %v319, %v347
    %v352 = vmul.f32 %v350, 1.442695
    %v353 = vpow.pop %v352
    %v354 = vmul.f32 %v351, 1.442695
    %v355 = vpow.pop %v354
    %358 = vset.pattern.permute.xlu0 0
    %359 = vperm.xlu0 %358, %v353
    %v360 = vpop.permute.xlu0 %359
    %361 = vset.pattern.permute.xlu0 0
    %362 = vperm.xlu0 %361, %v355
    %v363 = vpop.permute.xlu0 %362
    %v364 = vlaneseq
    %v365 = vshrl.u32 %v364, 7
    %v366 = vsub.s32 %v323, %v365
    %v367 = vrot.slane %v360, %v366
    %v368 = vlaneseq
    %v369 = vshrl.u32 %v368, 7
    %v370 = vsub.s32 %v323, %v369
    %v371 = vrot.slane %v363, %v370
    %v372 = vsel %vm332, %v371, %v367
    %v374 = vsel %vm335, %v372, 0.0
    %375 = vadd.xlane.f32.xlu0 %v374
    %v376 = vpop.xlane.xlu0 %375
    %v377 = vrcp.pop %v376
    %v379 = vlaneseq
    %v380 = vshrl.u32 %v379, 7
    %v381 = vsub.s32 0, %v380
    %v382 = vrot.slane %v377, %v381
    %v383 = vlaneseq
    %v384 = vshrl.u32 %v383, 7
    %v385 = vsub.s32 1, %v384
    %v386 = vrot.slane %v377, %v385
    %v389 = vmul.f32 %v353, %v382
    %v390 = vmul.f32 %v355, %v386
    %392 = vset.pattern.permute.xlu0 0
    %393 = vperm.xlu0 %392, %v389
    %v394 = vpop.permute.xlu0 %393
    %397 = vset.pattern.permute.xlu0 0
    %398 = vperm.xlu0 %397, %v390
    %v399 = vpop.permute.xlu0 %398
    %v401 = vmul.f32 %v76, %v394
    %v402 = vmul.f32 %v77, %v399
    %v403 = vsel %vm90, %v401, 0.0
    %v404 = vrot.slane %v403, 4
    %v405 = vadd.f32 %v403, %v404
    %v406 = vrot.slane %v405, 2
    %v407 = vadd.f32 %v405, %v406
    %v408 = vrot.slane %v407, 1
    %v409 = vadd.f32 %v407, %v408
    %v410 = vsel %vm90, %v402, 0.0
    %v411 = vrot.slane %v410, 4
    %v412 = vadd.f32 %v410, %v411
    %v413 = vrot.slane %v412, 2
    %v414 = vadd.f32 %v412, %v413
    %v415 = vrot.slane %v414, 1
    %v416 = vadd.f32 %v414, %v415
    %v417 = vlaneseq
    %v418 = vshrl.u32 %v417, 7
    %v419 = vsub.s32 %v323, %v418
    %v420 = vrot.slane %v394, %v419
    %v421 = vlaneseq
    %v422 = vshrl.u32 %v421, 7
    %v423 = vsub.s32 %v323, %v422
    %v424 = vrot.slane %v399, %v423
    %v425 = vsel %vm332, %v424, %v420
    %vm427 = vcmask 64512
    %v428 = vsel %vm427, %v425, 0.0
    %429 = vst [vmem:[#allocation9] sm:$0x3] %v428
    %v432 = vsel %vm332, %v416, %v409
    %vm434 = vcmask 254976
    %435 = vst.msk [vmem:[#allocation10] sm:$0x3] %vm434, %v432
    // Predicated region
    $region46: #{tpu_custom_call.1} parent=1 // pred_check
      _
    $region47: #{tpu_custom_call.1} parent=1 // pred_check_branch
      %437 = sbr.rel (0) target = $region49
    $region48: #{tpu_custom_call.1} parent=1 // pred_region
      %s439 = ssub.s32 32, 32
      %440 = vsyncadd [#allocation5], %s439
      %s442 = sshll.u32 [#allocation9], 4
      %s443 = int_to_ptr.vmem [resolvable:$true] %s442
      %445 = dma.vmem_to_hbm [thread:$0]  %s443, 32, %s8, [#allocation5]
    $region49: #{tpu_custom_call.1} parent=1 // pred_fallthru
      _
    // Predicated region
    $region50: #{tpu_custom_call.1} parent=1 // pred_check
      _
    $region51: #{tpu_custom_call.1} parent=1 // pred_check_branch
      %447 = sbr.rel (0) target = $region53
    $region52: #{tpu_custom_call.1} parent=1 // pred_region
      %s449 = ssub.s32 32, 32
      %450 = vsyncadd [#allocation11], %s449
      %s452 = sshll.u32 [#allocation10], 4
      %s453 = int_to_ptr.vmem [resolvable:$true] %s452
      %455 = dma.vmem_to_hbm [thread:$0]  %s453, 32, %s9, [#allocation11]
    $region53: #{tpu_custom_call.1} parent=1 // pred_fallthru
      _
    // Predicated region
    $region54: #{tpu_custom_call.1} parent=1 // pred_check
      _
    $region55: #{tpu_custom_call.1} parent=1 // pred_check_branch
      %457 = sbr.rel (0) target = $region57
    $region56: #{tpu_custom_call.1} parent=1 // pred_region
      %458 = dma.done [#allocation5], 32
    $region57: #{tpu_custom_call.1} parent=1 // pred_fallthru
      _
    // Predicated region
    $region58: #{tpu_custom_call.1} parent=1 // pred_check
      _
    $region59: #{tpu_custom_call.1} parent=1 // pred_check_branch
      %460 = sbr.rel (0) target = $region61
    $region60: #{tpu_custom_call.1} parent=1 // pred_region
      %461 = dma.done [#allocation11], 32
    $region61: #{tpu_custom_call.1} parent=1 // pred_fallthru
      _
    %462 = vsyncpa [#allocation4], 1
    %463 = vsyncpa [#allocation7], 1
    %464 = vsyncpa [#allocation5], 1
    %465 = vsyncpa [#allocation11], 1

</llo_original>
